<compile_context>
chip_gen: v5e
topology: v5e:2x2
jax: 0.10.0
libtpu: 0.0.40
codegen_flags: <defaults>
</compile_context>

<pallas_src>
import jax
import jax.numpy as jnp
from jax import lax
from jax.experimental import pallas as pl
from jax.experimental.pallas import tpu as pltpu


_VPU_CONV_MAX_C = 16  # at/below this channel count the 1x1 conv runs on the VPU


def _make_crp_kernel(n_stages, C, H, W, use_vpu_conv):
    L = H * W

    def kernel(x_ref, w_ref, idx_ref, o_ref):
        # x_ref / o_ref : (C, L)   (leading batch dim squeezed away)
        # w_ref         : (n_stages, C_in, C_out, 1)  [VPU path]
        #                 (n_stages, C_out, C_in)     [MXU path]
        # idx_ref       : (2, L) int32 -> [row index, col index] per position
        x = x_ref[...].astype(jnp.float32)

        h_idx = jnp.broadcast_to(idx_ref[0:1, :], (C, L))
        w_idx = jnp.broadcast_to(idx_ref[1:2, :], (C, L))

        # (lane_shift, valid_mask) taps for the separable pool; masks computed
        # once here (outside the stage loop) so comparisons are not re-emitted.
        h_taps = []
        w_taps = []
        for d in (1, 2):
            h_taps.append(((-d * W) % L, h_idx < (H - d)))  # take from row h+d
            h_taps.append(((d * W) % L, h_idx >= d))        # take from row h-d
            w_taps.append(((-d) % L, w_idx < (W - d)))      # take from col w+d
            w_taps.append((d % L, w_idx >= d))              # take from col w-d

        def pool5x5(t):
            # Separable 5x5, stride-1, pad-2 max pool (pad value -inf) on a
            # row-major flattened (C, H*W) tile: H pass, then W pass.
            for taps in (h_taps, w_taps):
                m = t
                for shift, valid in taps:
                    s = pltpu.roll(t, shift=shift, axis=1)
                    m = jnp.where(valid, jnp.maximum(m, s), m)
                t = m
            return t

        acc = x
        top = x
        for i in range(n_stages):
            top = pool5x5(top)
            if use_vpu_conv:
                # new_top[o, p] = sum_ci Wt[o, ci] * top[ci, p]
                # w_ref[i, ci] is the (C_out, 1) weight column for input ch ci:
                # (C_out, 1) * (1, L) broadcast-FMAs stay on the VPU, exact f32.
                conv = w_ref[i, 0] * top[0:1, :]
                for ci in range(1, C):
                    conv = conv + w_ref[i, ci] * top[ci:ci + 1, :]
                top = conv
            else:
                # Already lane-dense (C, L): no reshape around the matmul.
                top = jnp.dot(w_ref[i], top, preferred_element_type=jnp.float32)
            acc = acc + top

        o_ref[...] = acc.astype(o_ref.dtype)

    return kernel


def crp_block(x, weights):
    """x: (B, C, H, W); weights: (n_stages, C_out, C_in) from Conv2d(C, C, 1, bias=False)."""
    B, C, H, W = x.shape
    n_stages = weights.shape[0]
    assert weights.shape == (n_stages, C, C), "CRPBlock requires in_planes == out_planes"
    L = H * W

    use_vpu_conv = C <= _VPU_CONV_MAX_C
    if use_vpu_conv:
        # (n_stages, C_in, C_out, 1): w_arg[i, ci] is a (C_out, 1) column that
        # broadcasts over lanes inside the kernel.
        w_arg = jnp.transpose(weights, (0, 2, 1))[..., None]
        w_spec = pl.BlockSpec((n_stages, C, C, 1), lambda b: (0, 0, 0, 0))
    else:
        w_arg = weights
        w_spec = pl.BlockSpec((n_stages, C, C), lambda b: (0, 0, 0))

    # Lane-dense layout: last dim is H*W.
    x_flat = x.reshape(B, C, L)

    # Row / col index per flattened position (avoids integer div inside the kernel).
    pos = jnp.arange(L, dtype=jnp.int32)
    hw_idx = jnp.stack([pos // W, pos % W]).astype(jnp.int32)  # (2, L)

    # VMEM budget: double-buffered in/out image blocks + weights + live f32 intermediates.
    block_bytes = C * L * x.dtype.itemsize
    est = 4 * block_bytes + int(w_arg.size) * w_arg.dtype.itemsize + 8 * C * L * 4 + 2 * L * 4
    vmem_limit = int(min(max(2 * est, 32 * 1024 * 1024), 64 * 1024 * 1024))

    # TODO(synk): for very large feature maps whose (C, H*W) f32 block does not fit
    # VMEM (esp. v7x's 64 MiB), add a second parallel grid axis over H with a
    # recomputed 2*n_stages-row halo instead of whole-image blocks.
    out_flat = pl.pallas_call(
        _make_crp_kernel(n_stages, C, H, W, use_vpu_conv),
        out_shape=jax.ShapeDtypeStruct((B, C, L), x.dtype),
        grid_spec=pltpu.PrefetchScalarGridSpec(
            num_scalar_prefetch=0,
            grid=(B,),
            in_specs=[
                pl.BlockSpec((pl.Squeezed(), C, L), lambda b: (b, 0, 0)),
                w_spec,
                pl.BlockSpec((2, L), lambda b: (0, 0)),
            ],
            out_specs=pl.BlockSpec((pl.Squeezed(), C, L), lambda b: (b, 0, 0)),
        ),
        compiler_params=pltpu.CompilerParams(
            dimension_semantics=("parallel",),
            vmem_limit_bytes=vmem_limit,
        ),
    )(x_flat, w_arg, hw_idx)

    return out_flat.reshape(B, C, H, W)


def crp_block_ref(x, weights):
    """Pure-JAX reference mirroring the PyTorch forward (NCHW)."""
    n_stages = weights.shape[0]
    top = x
    out = x
    for i in range(n_stages):
        top = lax.reduce_window(
            top,
            -jnp.inf,
            lax.max,
            window_dimensions=(1, 1, 5, 5),
            window_strides=(1, 1, 1, 1),
            padding=((0, 0), (0, 0), (2, 2), (2, 2)),
        )
        top = jnp.einsum(
            "oi,bihw->bohw", weights[i], top, precision=lax.Precision.HIGHEST
        )
        out = top + out
    return out


if __name__ == "__main__":
    # in_planes == out_planes is required by the residual add in the module.
    B, C, H, W = 2, 4, 16, 16
    n_stages = 4

    key = jax.random.PRNGKey(0)
    kx, kw = jax.random.split(key)
    x = jax.random.normal(kx, (B, C, H, W), dtype=jnp.float32)
    # Conv2d(C, C, 1, bias=False) weight is (C_out, C_in, 1, 1); kept as (C_out, C_in).
    weights = 0.1 * jax.random.normal(kw, (n_stages, C, C), dtype=jnp.float32)

    out = jax.block_until_ready(crp_block(x, weights))

    ref = crp_block_ref(x, weights)
    assert out.shape == ref.shape and out.dtype == ref.dtype
    if not jnp.allclose(out, ref, rtol=1e-3, atol=1e-3):
        raise AssertionError("Pallas CRPBlock output does not match reference")

    print("KERNEL_OK")
</pallas_src>

<mosaic_0001>
module attributes {stable_mosaic.version = 11 : i64} {
  func.func @kernel(%arg0: i32, %arg1: memref<1x4x256xf32, #tpu.memory_space<vmem>>, %arg2: memref<4x4x4x1xf32, #tpu.memory_space<vmem>>, %arg3: memref<2x256xi32, #tpu.memory_space<vmem>>, %arg4: memref<1x4x256xf32, #tpu.memory_space<vmem>>) attributes {dimension_semantics = [#tpu.dimension_semantics<parallel>], iteration_bounds = array<i64: 2>, scalar_prefetch = 0 : i64, scratch_operands = 0 : i64, tpu.core_type = #tpu.core_type<tc>, window_params = [{transform_indices = @transform_0, window_bounds = array<i64: 1, 4, 256>}, {pipeline_mode = #tpu.pipeline_mode<synchronous>, transform_indices = @transform_1, window_bounds = array<i64: 4, 4, 4, 1>}, {pipeline_mode = #tpu.pipeline_mode<synchronous>, transform_indices = @transform_2, window_bounds = array<i64: 2, 256>}, {transform_indices = @transform_3, window_bounds = array<i64: 1, 4, 256>}]} {
    %c0 = arith.constant 0 : index
    %c0_0 = arith.constant 0 : index
    %c0_1 = arith.constant 0 : index
    %0 = vector.load %arg1[%c0, %c0_0, %c0_1] : memref<1x4x256xf32, #tpu.memory_space<vmem>>, vector<1x4x256xf32>
    %1 = vector.shape_cast %0 : vector<1x4x256xf32> to vector<4x256xf32>
    %c0_2 = arith.constant 0 : index
    %c0_3 = arith.constant 0 : index
    %2 = vector.load %arg3[%c0_2, %c0_3] : memref<2x256xi32, #tpu.memory_space<vmem>>, vector<1x256xi32>
    %3 = vector.shape_cast %2 : vector<1x256xi32> to vector<1x256xi32>
    %4 = vector.broadcast %3 : vector<1x256xi32> to vector<4x256xi32>
    %c1 = arith.constant 1 : index
    %c0_4 = arith.constant 0 : index
    %5 = vector.load %arg3[%c1, %c0_4] : memref<2x256xi32, #tpu.memory_space<vmem>>, vector<1x256xi32>
    %6 = vector.shape_cast %5 : vector<1x256xi32> to vector<1x256xi32>
    %7 = vector.broadcast %6 : vector<1x256xi32> to vector<4x256xi32>
    %c15_i32 = arith.constant 15 : i32
    %8 = vector.broadcast %c15_i32 : i32 to vector<4x256xi32>
    %9 = arith.cmpi slt, %4, %8 : vector<4x256xi32>
    %c1_i32 = arith.constant 1 : i32
    %10 = vector.broadcast %c1_i32 : i32 to vector<4x256xi32>
    %11 = arith.cmpi sge, %4, %10 : vector<4x256xi32>
    %c15_i32_5 = arith.constant 15 : i32
    %12 = vector.broadcast %c15_i32_5 : i32 to vector<4x256xi32>
    %13 = arith.cmpi slt, %7, %12 : vector<4x256xi32>
    %c1_i32_6 = arith.constant 1 : i32
    %14 = vector.broadcast %c1_i32_6 : i32 to vector<4x256xi32>
    %15 = arith.cmpi sge, %7, %14 : vector<4x256xi32>
    %c14_i32 = arith.constant 14 : i32
    %16 = vector.broadcast %c14_i32 : i32 to vector<4x256xi32>
    %17 = arith.cmpi slt, %4, %16 : vector<4x256xi32>
    %c2_i32 = arith.constant 2 : i32
    %18 = vector.broadcast %c2_i32 : i32 to vector<4x256xi32>
    %19 = arith.cmpi sge, %4, %18 : vector<4x256xi32>
    %c14_i32_7 = arith.constant 14 : i32
    %20 = vector.broadcast %c14_i32_7 : i32 to vector<4x256xi32>
    %21 = arith.cmpi slt, %7, %20 : vector<4x256xi32>
    %c2_i32_8 = arith.constant 2 : i32
    %22 = vector.broadcast %c2_i32_8 : i32 to vector<4x256xi32>
    %23 = arith.cmpi sge, %7, %22 : vector<4x256xi32>
    %c240_i32 = arith.constant 240 : i32
    %24 = tpu.dynamic_rotate %1 by %c240_i32 dim 1 : vector<4x256xf32>, i32 -> vector<4x256xf32>
    %25 = arith.maximumf %1, %24 : vector<4x256xf32>
    %26 = arith.select %9, %25, %1 : vector<4x256xi1>, vector<4x256xf32>
    %c16_i32 = arith.constant 16 : i32
    %27 = tpu.dynamic_rotate %1 by %c16_i32 dim 1 : vector<4x256xf32>, i32 -> vector<4x256xf32>
    %28 = arith.maximumf %26, %27 : vector<4x256xf32>
    %29 = arith.select %11, %28, %26 : vector<4x256xi1>, vector<4x256xf32>
    %c224_i32 = arith.constant 224 : i32
    %30 = tpu.dynamic_rotate %1 by %c224_i32 dim 1 : vector<4x256xf32>, i32 -> vector<4x256xf32>
    %31 = arith.maximumf %29, %30 : vector<4x256xf32>
    %32 = arith.select %17, %31, %29 : vector<4x256xi1>, vector<4x256xf32>
    %c32_i32 = arith.constant 32 : i32
    %33 = tpu.dynamic_rotate %1 by %c32_i32 dim 1 : vector<4x256xf32>, i32 -> vector<4x256xf32>
    %34 = arith.maximumf %32, %33 : vector<4x256xf32>
    %35 = arith.select %19, %34, %32 : vector<4x256xi1>, vector<4x256xf32>
    %c255_i32 = arith.constant 255 : i32
    %36 = tpu.dynamic_rotate %35 by %c255_i32 dim 1 : vector<4x256xf32>, i32 -> vector<4x256xf32>
    %37 = arith.maximumf %35, %36 : vector<4x256xf32>
    %38 = arith.select %13, %37, %35 : vector<4x256xi1>, vector<4x256xf32>
    %c1_i32_9 = arith.constant 1 : i32
    %39 = tpu.dynamic_rotate %35 by %c1_i32_9 dim 1 : vector<4x256xf32>, i32 -> vector<4x256xf32>
    %40 = arith.maximumf %38, %39 : vector<4x256xf32>
    %41 = arith.select %15, %40, %38 : vector<4x256xi1>, vector<4x256xf32>
    %c254_i32 = arith.constant 254 : i32
    %42 = tpu.dynamic_rotate %35 by %c254_i32 dim 1 : vector<4x256xf32>, i32 -> vector<4x256xf32>
    %43 = arith.maximumf %41, %42 : vector<4x256xf32>
    %44 = arith.select %21, %43, %41 : vector<4x256xi1>, vector<4x256xf32>
    %c2_i32_10 = arith.constant 2 : i32
    %45 = tpu.dynamic_rotate %35 by %c2_i32_10 dim 1 : vector<4x256xf32>, i32 -> vector<4x256xf32>
    %46 = arith.maximumf %44, %45 : vector<4x256xf32>
    %47 = arith.select %23, %46, %44 : vector<4x256xi1>, vector<4x256xf32>
    %c0_11 = arith.constant 0 : index
    %c0_12 = arith.constant 0 : index
    %c0_13 = arith.constant 0 : index
    %c0_14 = arith.constant 0 : index
    %48 = vector.load %arg2[%c0_11, %c0_12, %c0_13, %c0_14] : memref<4x4x4x1xf32, #tpu.memory_space<vmem>>, vector<1x1x4x1xf32>
    %49 = vector.shape_cast %48 : vector<1x1x4x1xf32> to vector<4x1xf32>
    %50 = vector.extract_strided_slice %47 {offsets = [0, 0], sizes = [1, 256], strides = [1, 1]} : vector<4x256xf32> to vector<1x256xf32>
    %51 = vector.broadcast %49 : vector<4x1xf32> to vector<4x256xf32>
    %52 = vector.broadcast %50 : vector<1x256xf32> to vector<4x256xf32>
    %53 = arith.mulf %51, %52 : vector<4x256xf32>
    %c0_15 = arith.constant 0 : index
    %c1_16 = arith.constant 1 : index
    %c0_17 = arith.constant 0 : index
    %c0_18 = arith.constant 0 : index
    %54 = vector.load %arg2[%c0_15, %c1_16, %c0_17, %c0_18] : memref<4x4x4x1xf32, #tpu.memory_space<vmem>>, vector<1x1x4x1xf32>
    %55 = vector.shape_cast %54 : vector<1x1x4x1xf32> to vector<4x1xf32>
    %56 = vector.extract_strided_slice %47 {offsets = [1, 0], sizes = [1, 256], strides = [1, 1]} : vector<4x256xf32> to vector<1x256xf32>
    %57 = vector.broadcast %55 : vector<4x1xf32> to vector<4x256xf32>
    %58 = vector.broadcast %56 : vector<1x256xf32> to vector<4x256xf32>
    %59 = arith.mulf %57, %58 : vector<4x256xf32>
    %60 = arith.addf %53, %59 : vector<4x256xf32>
    %c0_19 = arith.constant 0 : index
    %c2 = arith.constant 2 : index
    %c0_20 = arith.constant 0 : index
    %c0_21 = arith.constant 0 : index
    %61 = vector.load %arg2[%c0_19, %c2, %c0_20, %c0_21] : memref<4x4x4x1xf32, #tpu.memory_space<vmem>>, vector<1x1x4x1xf32>
    %62 = vector.shape_cast %61 : vector<1x1x4x1xf32> to vector<4x1xf32>
    %63 = vector.extract_strided_slice %47 {offsets = [2, 0], sizes = [1, 256], strides = [1, 1]} : vector<4x256xf32> to vector<1x256xf32>
    %64 = vector.broadcast %62 : vector<4x1xf32> to vector<4x256xf32>
    %65 = vector.broadcast %63 : vector<1x256xf32> to vector<4x256xf32>
    %66 = arith.mulf %64, %65 : vector<4x256xf32>
    %67 = arith.addf %60, %66 : vector<4x256xf32>
    %c0_22 = arith.constant 0 : index
    %c3 = arith.constant 3 : index
    %c0_23 = arith.constant 0 : index
    %c0_24 = arith.constant 0 : index
    %68 = vector.load %arg2[%c0_22, %c3, %c0_23, %c0_24] : memref<4x4x4x1xf32, #tpu.memory_space<vmem>>, vector<1x1x4x1xf32>
    %69 = vector.shape_cast %68 : vector<1x1x4x1xf32> to vector<4x1xf32>
    %70 = vector.extract_strided_slice %47 {offsets = [3, 0], sizes = [1, 256], strides = [1, 1]} : vector<4x256xf32> to vector<1x256xf32>
    %71 = vector.broadcast %69 : vector<4x1xf32> to vector<4x256xf32>
    %72 = vector.broadcast %70 : vector<1x256xf32> to vector<4x256xf32>
    %73 = arith.mulf %71, %72 : vector<4x256xf32>
    %74 = arith.addf %67, %73 : vector<4x256xf32>
    %75 = arith.addf %1, %74 : vector<4x256xf32>
    %c240_i32_25 = arith.constant 240 : i32
    %76 = tpu.dynamic_rotate %74 by %c240_i32_25 dim 1 : vector<4x256xf32>, i32 -> vector<4x256xf32>
    %77 = arith.maximumf %74, %76 : vector<4x256xf32>
    %78 = arith.select %9, %77, %74 : vector<4x256xi1>, vector<4x256xf32>
    %c16_i32_26 = arith.constant 16 : i32
    %79 = tpu.dynamic_rotate %74 by %c16_i32_26 dim 1 : vector<4x256xf32>, i32 -> vector<4x256xf32>
    %80 = arith.maximumf %78, %79 : vector<4x256xf32>
    %81 = arith.select %11, %80, %78 : vector<4x256xi1>, vector<4x256xf32>
    %c224_i32_27 = arith.constant 224 : i32
    %82 = tpu.dynamic_rotate %74 by %c224_i32_27 dim 1 : vector<4x256xf32>, i32 -> vector<4x256xf32>
    %83 = arith.maximumf %81, %82 : vector<4x256xf32>
    %84 = arith.select %17, %83, %81 : vector<4x256xi1>, vector<4x256xf32>
    %c32_i32_28 = arith.constant 32 : i32
    %85 = tpu.dynamic_rotate %74 by %c32_i32_28 dim 1 : vector<4x256xf32>, i32 -> vector<4x256xf32>
    %86 = arith.maximumf %84, %85 : vector<4x256xf32>
    %87 = arith.select %19, %86, %84 : vector<4x256xi1>, vector<4x256xf32>
    %c255_i32_29 = arith.constant 255 : i32
    %88 = tpu.dynamic_rotate %87 by %c255_i32_29 dim 1 : vector<4x256xf32>, i32 -> vector<4x256xf32>
    %89 = arith.maximumf %87, %88 : vector<4x256xf32>
    %90 = arith.select %13, %89, %87 : vector<4x256xi1>, vector<4x256xf32>
    %c1_i32_30 = arith.constant 1 : i32
    %91 = tpu.dynamic_rotate %87 by %c1_i32_30 dim 1 : vector<4x256xf32>, i32 -> vector<4x256xf32>
    %92 = arith.maximumf %90, %91 : vector<4x256xf32>
    %93 = arith.select %15, %92, %90 : vector<4x256xi1>, vector<4x256xf32>
    %c254_i32_31 = arith.constant 254 : i32
    %94 = tpu.dynamic_rotate %87 by %c254_i32_31 dim 1 : vector<4x256xf32>, i32 -> vector<4x256xf32>
    %95 = arith.maximumf %93, %94 : vector<4x256xf32>
    %96 = arith.select %21, %95, %93 : vector<4x256xi1>, vector<4x256xf32>
    %c2_i32_32 = arith.constant 2 : i32
    %97 = tpu.dynamic_rotate %87 by %c2_i32_32 dim 1 : vector<4x256xf32>, i32 -> vector<4x256xf32>
    %98 = arith.maximumf %96, %97 : vector<4x256xf32>
    %99 = arith.select %23, %98, %96 : vector<4x256xi1>, vector<4x256xf32>
    %c1_33 = arith.constant 1 : index
    %c0_34 = arith.constant 0 : index
    %c0_35 = arith.constant 0 : index
    %c0_36 = arith.constant 0 : index
    %100 = vector.load %arg2[%c1_33, %c0_34, %c0_35, %c0_36] : memref<4x4x4x1xf32, #tpu.memory_space<vmem>>, vector<1x1x4x1xf32>
    %101 = vector.shape_cast %100 : vector<1x1x4x1xf32> to vector<4x1xf32>
    %102 = vector.extract_strided_slice %99 {offsets = [0, 0], sizes = [1, 256], strides = [1, 1]} : vector<4x256xf32> to vector<1x256xf32>
    %103 = vector.broadcast %101 : vector<4x1xf32> to vector<4x256xf32>
    %104 = vector.broadcast %102 : vector<1x256xf32> to vector<4x256xf32>
    %105 = arith.mulf %103, %104 : vector<4x256xf32>
    %c1_37 = arith.constant 1 : index
    %c1_38 = arith.constant 1 : index
    %c0_39 = arith.constant 0 : index
    %c0_40 = arith.constant 0 : index
    %106 = vector.load %arg2[%c1_37, %c1_38, %c0_39, %c0_40] : memref<4x4x4x1xf32, #tpu.memory_space<vmem>>, vector<1x1x4x1xf32>
    %107 = vector.shape_cast %106 : vector<1x1x4x1xf32> to vector<4x1xf32>
    %108 = vector.extract_strided_slice %99 {offsets = [1, 0], sizes = [1, 256], strides = [1, 1]} : vector<4x256xf32> to vector<1x256xf32>
    %109 = vector.broadcast %107 : vector<4x1xf32> to vector<4x256xf32>
    %110 = vector.broadcast %108 : vector<1x256xf32> to vector<4x256xf32>
    %111 = arith.mulf %109, %110 : vector<4x256xf32>
    %112 = arith.addf %105, %111 : vector<4x256xf32>
    %c1_41 = arith.constant 1 : index
    %c2_42 = arith.constant 2 : index
    %c0_43 = arith.constant 0 : index
    %c0_44 = arith.constant 0 : index
    %113 = vector.load %arg2[%c1_41, %c2_42, %c0_43, %c0_44] : memref<4x4x4x1xf32, #tpu.memory_space<vmem>>, vector<1x1x4x1xf32>
    %114 = vector.shape_cast %113 : vector<1x1x4x1xf32> to vector<4x1xf32>
    %115 = vector.extract_strided_slice %99 {offsets = [2, 0], sizes = [1, 256], strides = [1, 1]} : vector<4x256xf32> to vector<1x256xf32>
    %116 = vector.broadcast %114 : vector<4x1xf32> to vector<4x256xf32>
    %117 = vector.broadcast %115 : vector<1x256xf32> to vector<4x256xf32>
    %118 = arith.mulf %116, %117 : vector<4x256xf32>
    %119 = arith.addf %112, %118 : vector<4x256xf32>
    %c1_45 = arith.constant 1 : index
    %c3_46 = arith.constant 3 : index
    %c0_47 = arith.constant 0 : index
    %c0_48 = arith.constant 0 : index
    %120 = vector.load %arg2[%c1_45, %c3_46, %c0_47, %c0_48] : memref<4x4x4x1xf32, #tpu.memory_space<vmem>>, vector<1x1x4x1xf32>
    %121 = vector.shape_cast %120 : vector<1x1x4x1xf32> to vector<4x1xf32>
    %122 = vector.extract_strided_slice %99 {offsets = [3, 0], sizes = [1, 256], strides = [1, 1]} : vector<4x256xf32> to vector<1x256xf32>
    %123 = vector.broadcast %121 : vector<4x1xf32> to vector<4x256xf32>
    %124 = vector.broadcast %122 : vector<1x256xf32> to vector<4x256xf32>
    %125 = arith.mulf %123, %124 : vector<4x256xf32>
    %126 = arith.addf %119, %125 : vector<4x256xf32>
    %127 = arith.addf %75, %126 : vector<4x256xf32>
    %c240_i32_49 = arith.constant 240 : i32
    %128 = tpu.dynamic_rotate %126 by %c240_i32_49 dim 1 : vector<4x256xf32>, i32 -> vector<4x256xf32>
    %129 = arith.maximumf %126, %128 : vector<4x256xf32>
    %130 = arith.select %9, %129, %126 : vector<4x256xi1>, vector<4x256xf32>
    %c16_i32_50 = arith.constant 16 : i32
    %131 = tpu.dynamic_rotate %126 by %c16_i32_50 dim 1 : vector<4x256xf32>, i32 -> vector<4x256xf32>
    %132 = arith.maximumf %130, %131 : vector<4x256xf32>
    %133 = arith.select %11, %132, %130 : vector<4x256xi1>, vector<4x256xf32>
    %c224_i32_51 = arith.constant 224 : i32
    %134 = tpu.dynamic_rotate %126 by %c224_i32_51 dim 1 : vector<4x256xf32>, i32 -> vector<4x256xf32>
    %135 = arith.maximumf %133, %134 : vector<4x256xf32>
    %136 = arith.select %17, %135, %133 : vector<4x256xi1>, vector<4x256xf32>
    %c32_i32_52 = arith.constant 32 : i32
    %137 = tpu.dynamic_rotate %126 by %c32_i32_52 dim 1 : vector<4x256xf32>, i32 -> vector<4x256xf32>
    %138 = arith.maximumf %136, %137 : vector<4x256xf32>
    %139 = arith.select %19, %138, %136 : vector<4x256xi1>, vector<4x256xf32>
    %c255_i32_53 = arith.constant 255 : i32
    %140 = tpu.dynamic_rotate %139 by %c255_i32_53 dim 1 : vector<4x256xf32>, i32 -> vector<4x256xf32>
    %141 = arith.maximumf %139, %140 : vector<4x256xf32>
    %142 = arith.select %13, %141, %139 : vector<4x256xi1>, vector<4x256xf32>
    %c1_i32_54 = arith.constant 1 : i32
    %143 = tpu.dynamic_rotate %139 by %c1_i32_54 dim 1 : vector<4x256xf32>, i32 -> vector<4x256xf32>
    %144 = arith.maximumf %142, %143 : vector<4x256xf32>
    %145 = arith.select %15, %144, %142 : vector<4x256xi1>, vector<4x256xf32>
    %c254_i32_55 = arith.constant 254 : i32
    %146 = tpu.dynamic_rotate %139 by %c254_i32_55 dim 1 : vector<4x256xf32>, i32 -> vector<4x256xf32>
    %147 = arith.maximumf %145, %146 : vector<4x256xf32>
    %148 = arith.select %21, %147, %145 : vector<4x256xi1>, vector<4x256xf32>
    %c2_i32_56 = arith.constant 2 : i32
    %149 = tpu.dynamic_rotate %139 by %c2_i32_56 dim 1 : vector<4x256xf32>, i32 -> vector<4x256xf32>
    %150 = arith.maximumf %148, %149 : vector<4x256xf32>
    %151 = arith.select %23, %150, %148 : vector<4x256xi1>, vector<4x256xf32>
    %c2_57 = arith.constant 2 : index
    %c0_58 = arith.constant 0 : index
    %c0_59 = arith.constant 0 : index
    %c0_60 = arith.constant 0 : index
    %152 = vector.load %arg2[%c2_57, %c0_58, %c0_59, %c0_60] : memref<4x4x4x1xf32, #tpu.memory_space<vmem>>, vector<1x1x4x1xf32>
    %153 = vector.shape_cast %152 : vector<1x1x4x1xf32> to vector<4x1xf32>
    %154 = vector.extract_strided_slice %151 {offsets = [0, 0], sizes = [1, 256], strides = [1, 1]} : vector<4x256xf32> to vector<1x256xf32>
    %155 = vector.broadcast %153 : vector<4x1xf32> to vector<4x256xf32>
    %156 = vector.broadcast %154 : vector<1x256xf32> to vector<4x256xf32>
    %157 = arith.mulf %155, %156 : vector<4x256xf32>
    %c2_61 = arith.constant 2 : index
    %c1_62 = arith.constant 1 : index
    %c0_63 = arith.constant 0 : index
    %c0_64 = arith.constant 0 : index
    %158 = vector.load %arg2[%c2_61, %c1_62, %c0_63, %c0_64] : memref<4x4x4x1xf32, #tpu.memory_space<vmem>>, vector<1x1x4x1xf32>
    %159 = vector.shape_cast %158 : vector<1x1x4x1xf32> to vector<4x1xf32>
    %160 = vector.extract_strided_slice %151 {offsets = [1, 0], sizes = [1, 256], strides = [1, 1]} : vector<4x256xf32> to vector<1x256xf32>
    %161 = vector.broadcast %159 : vector<4x1xf32> to vector<4x256xf32>
    %162 = vector.broadcast %160 : vector<1x256xf32> to vector<4x256xf32>
    %163 = arith.mulf %161, %162 : vector<4x256xf32>
    %164 = arith.addf %157, %163 : vector<4x256xf32>
    %c2_65 = arith.constant 2 : index
    %c2_66 = arith.constant 2 : index
    %c0_67 = arith.constant 0 : index
    %c0_68 = arith.constant 0 : index
    %165 = vector.load %arg2[%c2_65, %c2_66, %c0_67, %c0_68] : memref<4x4x4x1xf32, #tpu.memory_space<vmem>>, vector<1x1x4x1xf32>
    %166 = vector.shape_cast %165 : vector<1x1x4x1xf32> to vector<4x1xf32>
    %167 = vector.extract_strided_slice %151 {offsets = [2, 0], sizes = [1, 256], strides = [1, 1]} : vector<4x256xf32> to vector<1x256xf32>
    %168 = vector.broadcast %166 : vector<4x1xf32> to vector<4x256xf32>
    %169 = vector.broadcast %167 : vector<1x256xf32> to vector<4x256xf32>
    %170 = arith.mulf %168, %169 : vector<4x256xf32>
    %171 = arith.addf %164, %170 : vector<4x256xf32>
    %c2_69 = arith.constant 2 : index
    %c3_70 = arith.constant 3 : index
    %c0_71 = arith.constant 0 : index
    %c0_72 = arith.constant 0 : index
    %172 = vector.load %arg2[%c2_69, %c3_70, %c0_71, %c0_72] : memref<4x4x4x1xf32, #tpu.memory_space<vmem>>, vector<1x1x4x1xf32>
    %173 = vector.shape_cast %172 : vector<1x1x4x1xf32> to vector<4x1xf32>
    %174 = vector.extract_strided_slice %151 {offsets = [3, 0], sizes = [1, 256], strides = [1, 1]} : vector<4x256xf32> to vector<1x256xf32>
    %175 = vector.broadcast %173 : vector<4x1xf32> to vector<4x256xf32>
    %176 = vector.broadcast %174 : vector<1x256xf32> to vector<4x256xf32>
    %177 = arith.mulf %175, %176 : vector<4x256xf32>
    %178 = arith.addf %171, %177 : vector<4x256xf32>
    %179 = arith.addf %127, %178 : vector<4x256xf32>
    %c240_i32_73 = arith.constant 240 : i32
    %180 = tpu.dynamic_rotate %178 by %c240_i32_73 dim 1 : vector<4x256xf32>, i32 -> vector<4x256xf32>
    %181 = arith.maximumf %178, %180 : vector<4x256xf32>
    %182 = arith.select %9, %181, %178 : vector<4x256xi1>, vector<4x256xf32>
    %c16_i32_74 = arith.constant 16 : i32
    %183 = tpu.dynamic_rotate %178 by %c16_i32_74 dim 1 : vector<4x256xf32>, i32 -> vector<4x256xf32>
    %184 = arith.maximumf %182, %183 : vector<4x256xf32>
    %185 = arith.select %11, %184, %182 : vector<4x256xi1>, vector<4x256xf32>
    %c224_i32_75 = arith.constant 224 : i32
    %186 = tpu.dynamic_rotate %178 by %c224_i32_75 dim 1 : vector<4x256xf32>, i32 -> vector<4x256xf32>
    %187 = arith.maximumf %185, %186 : vector<4x256xf32>
    %188 = arith.select %17, %187, %185 : vector<4x256xi1>, vector<4x256xf32>
    %c32_i32_76 = arith.constant 32 : i32
    %189 = tpu.dynamic_rotate %178 by %c32_i32_76 dim 1 : vector<4x256xf32>, i32 -> vector<4x256xf32>
    %190 = arith.maximumf %188, %189 : vector<4x256xf32>
    %191 = arith.select %19, %190, %188 : vector<4x256xi1>, vector<4x256xf32>
    %c255_i32_77 = arith.constant 255 : i32
    %192 = tpu.dynamic_rotate %191 by %c255_i32_77 dim 1 : vector<4x256xf32>, i32 -> vector<4x256xf32>
    %193 = arith.maximumf %191, %192 : vector<4x256xf32>
    %194 = arith.select %13, %193, %191 : vector<4x256xi1>, vector<4x256xf32>
    %c1_i32_78 = arith.constant 1 : i32
    %195 = tpu.dynamic_rotate %191 by %c1_i32_78 dim 1 : vector<4x256xf32>, i32 -> vector<4x256xf32>
    %196 = arith.maximumf %194, %195 : vector<4x256xf32>
    %197 = arith.select %15, %196, %194 : vector<4x256xi1>, vector<4x256xf32>
    %c254_i32_79 = arith.constant 254 : i32
    %198 = tpu.dynamic_rotate %191 by %c254_i32_79 dim 1 : vector<4x256xf32>, i32 -> vector<4x256xf32>
    %199 = arith.maximumf %197, %198 : vector<4x256xf32>
    %200 = arith.select %21, %199, %197 : vector<4x256xi1>, vector<4x256xf32>
    %c2_i32_80 = arith.constant 2 : i32
    %201 = tpu.dynamic_rotate %191 by %c2_i32_80 dim 1 : vector<4x256xf32>, i32 -> vector<4x256xf32>
    %202 = arith.maximumf %200, %201 : vector<4x256xf32>
    %203 = arith.select %23, %202, %200 : vector<4x256xi1>, vector<4x256xf32>
    %c3_81 = arith.constant 3 : index
    %c0_82 = arith.constant 0 : index
    %c0_83 = arith.constant 0 : index
    %c0_84 = arith.constant 0 : index
    %204 = vector.load %arg2[%c3_81, %c0_82, %c0_83, %c0_84] : memref<4x4x4x1xf32, #tpu.memory_space<vmem>>, vector<1x1x4x1xf32>
    %205 = vector.shape_cast %204 : vector<1x1x4x1xf32> to vector<4x1xf32>
    %206 = vector.extract_strided_slice %203 {offsets = [0, 0], sizes = [1, 256], strides = [1, 1]} : vector<4x256xf32> to vector<1x256xf32>
    %207 = vector.broadcast %205 : vector<4x1xf32> to vector<4x256xf32>
    %208 = vector.broadcast %206 : vector<1x256xf32> to vector<4x256xf32>
    %209 = arith.mulf %207, %208 : vector<4x256xf32>
    %c3_85 = arith.constant 3 : index
    %c1_86 = arith.constant 1 : index
    %c0_87 = arith.constant 0 : index
    %c0_88 = arith.constant 0 : index
    %210 = vector.load %arg2[%c3_85, %c1_86, %c0_87, %c0_88] : memref<4x4x4x1xf32, #tpu.memory_space<vmem>>, vector<1x1x4x1xf32>
    %211 = vector.shape_cast %210 : vector<1x1x4x1xf32> to vector<4x1xf32>
    %212 = vector.extract_strided_slice %203 {offsets = [1, 0], sizes = [1, 256], strides = [1, 1]} : vector<4x256xf32> to vector<1x256xf32>
    %213 = vector.broadcast %211 : vector<4x1xf32> to vector<4x256xf32>
    %214 = vector.broadcast %212 : vector<1x256xf32> to vector<4x256xf32>
    %215 = arith.mulf %213, %214 : vector<4x256xf32>
    %216 = arith.addf %209, %215 : vector<4x256xf32>
    %c3_89 = arith.constant 3 : index
    %c2_90 = arith.constant 2 : index
    %c0_91 = arith.constant 0 : index
    %c0_92 = arith.constant 0 : index
    %217 = vector.load %arg2[%c3_89, %c2_90, %c0_91, %c0_92] : memref<4x4x4x1xf32, #tpu.memory_space<vmem>>, vector<1x1x4x1xf32>
    %218 = vector.shape_cast %217 : vector<1x1x4x1xf32> to vector<4x1xf32>
    %219 = vector.extract_strided_slice %203 {offsets = [2, 0], sizes = [1, 256], strides = [1, 1]} : vector<4x256xf32> to vector<1x256xf32>
    %220 = vector.broadcast %218 : vector<4x1xf32> to vector<4x256xf32>
    %221 = vector.broadcast %219 : vector<1x256xf32> to vector<4x256xf32>
    %222 = arith.mulf %220, %221 : vector<4x256xf32>
    %223 = arith.addf %216, %222 : vector<4x256xf32>
    %c3_93 = arith.constant 3 : index
    %c3_94 = arith.constant 3 : index
    %c0_95 = arith.constant 0 : index
    %c0_96 = arith.constant 0 : index
    %224 = vector.load %arg2[%c3_93, %c3_94, %c0_95, %c0_96] : memref<4x4x4x1xf32, #tpu.memory_space<vmem>>, vector<1x1x4x1xf32>
    %225 = vector.shape_cast %224 : vector<1x1x4x1xf32> to vector<4x1xf32>
    %226 = vector.extract_strided_slice %203 {offsets = [3, 0], sizes = [1, 256], strides = [1, 1]} : vector<4x256xf32> to vector<1x256xf32>
    %227 = vector.broadcast %225 : vector<4x1xf32> to vector<4x256xf32>
    %228 = vector.broadcast %226 : vector<1x256xf32> to vector<4x256xf32>
    %229 = arith.mulf %227, %228 : vector<4x256xf32>
    %230 = arith.addf %223, %229 : vector<4x256xf32>
    %231 = arith.addf %179, %230 : vector<4x256xf32>
    %c0_97 = arith.constant 0 : index
    %c0_98 = arith.constant 0 : index
    %c0_99 = arith.constant 0 : index
    %232 = vector.load %arg4[%c0_97, %c0_98, %c0_99] : memref<1x4x256xf32, #tpu.memory_space<vmem>>, vector<1x4x256xf32>
    %233 = vector.shape_cast %232 : vector<1x4x256xf32> to vector<4x256xf32>
    %234 = vector.shape_cast %231 : vector<4x256xf32> to vector<1x4x256xf32>
    tpu.vector_store %arg4[%c0_97, %c0_98, %c0_99], %234 {strides = array<i32>} : memref<1x4x256xf32, #tpu.memory_space<vmem>>, vector<1x4x256xf32>,
    return
  }
  func.func @transform_0(%arg0: i32) -> (i32, i32, i32) {
    %c0_i32 = arith.constant 0 : i32
    %c0_i32_0 = arith.constant 0 : i32
    %c0_i32_1 = arith.constant 0 : i32
    return %arg0, %c0_i32, %c0_i32_0 : i32, i32, i32
  }
  func.func @transform_1(%arg0: i32) -> (i32, i32, i32, i32) {
    %c0_i32 = arith.constant 0 : i32
    %c0_i32_0 = arith.constant 0 : i32
    %c0_i32_1 = arith.constant 0 : i32
    %c0_i32_2 = arith.constant 0 : i32
    %c0_i32_3 = arith.constant 0 : i32
    return %c0_i32, %c0_i32_0, %c0_i32_1, %c0_i32_2 : i32, i32, i32, i32
  }
  func.func @transform_2(%arg0: i32) -> (i32, i32) {
    %c0_i32 = arith.constant 0 : i32
    %c0_i32_0 = arith.constant 0 : i32
    %c0_i32_1 = arith.constant 0 : i32
    return %c0_i32, %c0_i32_0 : i32, i32
  }
  func.func @transform_3(%arg0: i32) -> (i32, i32, i32) {
    %c0_i32 = arith.constant 0 : i32
    %c0_i32_0 = arith.constant 0 : i32
    %c0_i32_1 = arith.constant 0 : i32
    return %arg0, %c0_i32, %c0_i32_0 : i32, i32, i32
  }
}

</mosaic_0001>

<llo_original>
// kernel: tpu_custom_call.1
$region0: #{tpu_custom_call.1}
  #allocation0 [shape = 'u32[]', space=smem, size = 0x4, offset = 0x4, fixed_abs, tag = 'smem constant byte address 0x4 - core index']
  #allocation1 [shape = 'u32[72,128]{1,0:T(1,128)}', space=vmem, size = 0x9000, scoped, tag = 'internal scratch']
  %s0 = inlined_call_operand.vmem [shape: f32[2,4,256], index: 0, kind: input, shape index: {}]
  %s1 = inlined_call_operand.vmem [shape: f32[4,4,4,1], index: 1, kind: input, shape index: {}]
  %s2 = inlined_call_operand.vmem [shape: s32[2,256], index: 2, kind: input, shape index: {}]
  %s3 = inlined_call_operand.hbm [shape: f32[2,4,256], index: 3, kind: output, shape index: {}]
  %s4 = sld [smem:[#allocation0]]
  $region45: #{tpu_custom_call.1} parent=0
    _
  %s6 = ssub.s32 1, %s4
  %s7 = scalar_select 0, %s6, %s4
  $region1: #{tpu_custom_call.1} parent=0
    #allocation2 [shape = 'u8[8192]{0}', space=vmem, size = 0x2000, scoped, tag = 'output window, operand 0']
    #allocation3 [shape = 's32[2]{0}', space=sflag, size = 0x8, scoped, tag = 'scoped memory for tpu_custom_call.1']
    %8 = vsyncpa [#allocation3], 0
    %s9 = scalar_lea.sflag [#allocation3], 1
    %10 = vsyncpa %s9, 0
    loop: start=0, step=1, limit=4
    $region2: #{tpu_custom_call.1} parent=1 // loop_pre_header
      _
    $region3: #{tpu_custom_call.1} parent=1 // loop_header
      %s12 = sphi 0, %s16
      %p13 = scmp.ge.s32.totalorder %s12, 4
      %s22 = sphi 0, %s24
      %s25 = sphi 0, %s22
      %s26 = sphi 0, %s25
      %s42 = sphi 0, %s26
      %s46 = sphi 0, %s46
      %s48 = sphi 0, %s46
      %s49 = sphi 0, %s48
      %s63 = sphi 0, %s49
      %s67 = sphi 0, %s67
      %s69 = sphi 0, %s67
      %s70 = sphi 0, %s69
      %s84 = sphi 0, %s70
      %s90 = sphi 0, %s92
      %s93 = sphi 0, %s90
      %s94 = sphi 0, %s93
      %s110 = sphi 0, %s94
    $region4: #{tpu_custom_call.1} parent=1 // loop_header_branch
      %15 = sbr.rel (%p13) target = $region8
    $region5: #{tpu_custom_call.1} parent=1 // loop_body
      %s17 = ssub.s32 %s12, 1
      %s18 = ssub.s32 %s12, 2
      %s19 = sadd.s32 %s12, 1
      %s20 = ssub.s32 %s12, %s19
      %p21 = scmp.eq.s32.totalorder %s20, 0
      %s23 = sadd.s32 %s22, 1
      %s24 = scalar_select %p21, %s22, %s23
      %p27 = pneg %p21
      %p28 = scmp.eq.s32.totalorder %s12, 1
      %p29 = por %p27, %p28
      %p30 = scmp.ne.s32.totalorder %s22, %s25
      %p31 = scmp.eq.s32.totalorder %s12, 0
      %p32 = por %p30, %p31
      %p33 = scmp.ne.s32.totalorder %s22, %s25
      %p34 = scmp.eq.s32.totalorder %s17, 1
      %p35 = por %p33, %p34
      %p36 = scmp.ne.s32.totalorder %s25, %s26
      %p37 = scmp.eq.s32.totalorder %s17, 0
      %p38 = por %p36, %p37
      %p39 = scmp.ne.s32.totalorder %s25, %s26
      %p40 = scmp.eq.s32.totalorder %s18, 1
      %p41 = por %p39, %p40
      %p43 = scmp.ne.s32.totalorder %s26, %s42
      %p44 = scmp.eq.s32.totalorder %s18, 0
      %p45 = por %p43, %p44
      %s47 = sadd.s32 %s46, 1
      %p50 = scmp.eq.s32.totalorder %s12, 1
      %p51 = scmp.ne.s32.totalorder %s46, %s48
      %p52 = scmp.eq.s32.totalorder %s12, 0
      %p53 = por %p51, %p52
      %p54 = scmp.ne.s32.totalorder %s46, %s48
      %p55 = scmp.eq.s32.totalorder %s17, 1
      %p56 = por %p54, %p55
      %p57 = scmp.ne.s32.totalorder %s48, %s49
      %p58 = scmp.eq.s32.totalorder %s17, 0
      %p59 = por %p57, %p58
      %p60 = scmp.ne.s32.totalorder %s48, %s49
      %p61 = scmp.eq.s32.totalorder %s18, 1
      %p62 = por %p60, %p61
      %p64 = scmp.ne.s32.totalorder %s49, %s63
      %p65 = scmp.eq.s32.totalorder %s18, 0
      %p66 = por %p64, %p65
      %s68 = sadd.s32 %s67, 1
      %p71 = scmp.eq.s32.totalorder %s12, 1
      %p72 = scmp.ne.s32.totalorder %s67, %s69
      %p73 = scmp.eq.s32.totalorder %s12, 0
      %p74 = por %p72, %p73
      %p75 = scmp.ne.s32.totalorder %s67, %s69
      %p76 = scmp.eq.s32.totalorder %s17, 1
      %p77 = por %p75, %p76
      %p78 = scmp.ne.s32.totalorder %s69, %s70
      %p79 = scmp.eq.s32.totalorder %s17, 0
      %p80 = por %p78, %p79
      %p81 = scmp.ne.s32.totalorder %s69, %s70
      %p82 = scmp.eq.s32.totalorder %s18, 1
      %p83 = por %p81, %p82
      %p85 = scmp.ne.s32.totalorder %s70, %s84
      %p86 = scmp.eq.s32.totalorder %s18, 0
      %p87 = por %p85, %p86
      %s88 = ssub.s32 %s12, %s19
      %p89 = scmp.eq.s32.totalorder %s88, 0
      %s91 = sadd.s32 %s90, 1
      %s92 = scalar_select %p89, %s90, %s91
      %p95 = pneg %p89
      %p96 = scmp.eq.s32.totalorder %s12, 1
      %p97 = por %p95, %p96
      %p98 = scmp.ne.s32.totalorder %s90, %s93
      %p99 = scmp.eq.s32.totalorder %s12, 0
      %p100 = por %p98, %p99
      %p101 = scmp.ne.s32.totalorder %s90, %s93
      %p102 = scmp.eq.s32.totalorder %s17, 1
      %p103 = por %p101, %p102
      %p104 = scmp.ne.s32.totalorder %s93, %s94
      %p105 = scmp.eq.s32.totalorder %s17, 0
      %p106 = por %p104, %p105
      %p107 = scmp.ne.s32.totalorder %s93, %s94
      %p108 = scmp.eq.s32.totalorder %s18, 1
      %p109 = por %p107, %p108
      %p111 = scmp.ne.s32.totalorder %s94, %s110
      %p112 = scmp.eq.s32.totalorder %s18, 0
      %p113 = por %p111, %p112
      %p114 = scmp.le.s32.totalorder 1, %s12
      %p115 = scmp.lt.s32.totalorder %s12, 3
      %p116 = pnand %p114, %p115
      %p117 = pneg %p116
      // Predicated region
      $region9: #{tpu_custom_call.1} parent=5 // pred_check
        _
      $region10: #{tpu_custom_call.1} parent=5 // pred_check_branch
        %119 = sbr.rel (%p116) target = $region12
      $region11: #{tpu_custom_call.1} parent=5 // pred_region
        %s120 = ssub.s32 %s12, 1
        // Predicated region
        $region13: #{tpu_custom_call.1} parent=11 // pred_check
          %p121 = pneg %p59
        $region14: #{tpu_custom_call.1} parent=11 // pred_check_branch
          %123 = sbr.rel (%p121) target = $region16
        $region15: #{tpu_custom_call.1} parent=11 // pred_region
          _
        $region16: #{tpu_custom_call.1} parent=11 // pred_fallthru
          _
        // Predicated region
        $region17: #{tpu_custom_call.1} parent=11 // pred_check
          %p124 = pneg %p80
        $region18: #{tpu_custom_call.1} parent=11 // pred_check_branch
          %126 = sbr.rel (%p124) target = $region20
        $region19: #{tpu_custom_call.1} parent=11 // pred_region
          _
        $region20: #{tpu_custom_call.1} parent=11 // pred_fallthru
          _
      $region12: #{tpu_custom_call.1} parent=5 // pred_fallthru
        _
      %p127 = scmp.lt.s32.totalorder %s12, 2
      // Predicated region
      $region21: #{tpu_custom_call.1} parent=5 // pred_check
        %p128 = pneg %p127
      $region22: #{tpu_custom_call.1} parent=5 // pred_check_branch
        %130 = sbr.rel (%p128) target = $region24
      $region23: #{tpu_custom_call.1} parent=5 // pred_region
        // Predicated region
        $region25: #{tpu_custom_call.1} parent=23 // pred_check
          %p131 = pneg %p32
        $region26: #{tpu_custom_call.1} parent=23 // pred_check_branch
          %133 = sbr.rel (%p131) target = $region28
        $region27: #{tpu_custom_call.1} parent=23 // pred_region
          %p134 = scmp.lt.s32.totalorder %s12, 1
          %s135 = scalar_select %p134, %s12, 1
          %s136 = smul.addr %s135, 2
          %s137 = smul.addr %s136, 4
          %s138 = scalar_lea.vmem %s0, %s137
        $region28: #{tpu_custom_call.1} parent=23 // pred_fallthru
          _
      $region24: #{tpu_custom_call.1} parent=5 // pred_fallthru
        _
      %p139 = scmp.le.s32.totalorder 1, %s12
      %p140 = scmp.lt.s32.totalorder %s12, 3
      %p141 = pnand %p139, %p140
      %p142 = pneg %p141
      // Predicated region
      $region29: #{tpu_custom_call.1} parent=5 // pred_check
        _
      $region30: #{tpu_custom_call.1} parent=5 // pred_check_branch
        %144 = sbr.rel (%p141) target = $region32
      $region31: #{tpu_custom_call.1} parent=5 // pred_region
        %s145 = ssub.s32 %s12, 1
        %p146 = scmp.lt.s32.totalorder %s17, 1
        %s147 = scalar_select %p146, %s17, 1
        %s148 = smul.addr %s147, 2
        %s149 = smul.addr %s148, 4
        %s150 = scalar_lea.vmem %s0, %s149
        %p151 = pneg %p38
        %p152 = pneg %p35
        %p153 = pneg %p59
        %p154 = pneg %p56
        %p155 = pneg %p80
        %p156 = pneg %p77
        %p157 = pneg %p106
        %p158 = pneg %p103
        %s159 = sand.u32 %s93, 1
        %s160 = scalar_lea.sflag [#allocation3], %s159
        %s161 = sand.u32 %s93, 1
        %s162 = smul.addr %s161, 8
        %s163 = scalar_lea.vmem [#allocation2], %s162
        %p164 = scmp.lt.s32.totalorder %s17, 1
        %s165 = scalar_select %p164, %s17, 1
        %s166 = smul.addr %s165, 2
        %s167 = smul.addr %s166, 4
        %s168 = scalar_lea.vmem %s0, %s167
        %v169 = vld [vmem:[%s168] sm:$0xff]
        %v170 = vld [vmem:[%s2] ss:$2 sm:$0x3]
        %v171 = vperm.slane %v170, 0
        %v172 = vperm.slane %v170, 1
        %s173 = scalar_lea.vmem %s2, 1
        %v174 = vld [vmem:[%s173] ss:$2 sm:$0x3]
        %v175 = vperm.slane %v174, 0
        %v176 = vperm.slane %v174, 1
        %vm177 = vcmp.lt.s32.totalorder %v171, 15
        %vm178 = vcmp.lt.s32.totalorder %v172, 15
        %vm179 = vcmp.ge.s32.totalorder %v171, 1
        %vm180 = vcmp.ge.s32.totalorder %v172, 1
        %vm181 = vcmp.lt.s32.totalorder %v175, 15
        %vm182 = vcmp.lt.s32.totalorder %v176, 15
        %vm183 = vcmp.ge.s32.totalorder %v175, 1
        %vm184 = vcmp.ge.s32.totalorder %v176, 1
        %vm185 = vcmp.lt.s32.totalorder %v171, 14
        %vm186 = vcmp.lt.s32.totalorder %v172, 14
        %vm187 = vcmp.ge.s32.totalorder %v171, 2
        %vm188 = vcmp.ge.s32.totalorder %v172, 2
        %vm189 = vcmp.lt.s32.totalorder %v175, 14
        %vm190 = vcmp.lt.s32.totalorder %v176, 14
        %vm191 = vcmp.ge.s32.totalorder %v175, 2
        %vm192 = vcmp.ge.s32.totalorder %v176, 2
        %194 = vst [vmem:[#allocation1] ss:$2 sm:$0xff] %v169
        %v195 = vld.sshfl [vmem:[#allocation1] sm:$0xff pattern:$0x75316420]
        %v196 = vld.sshfl [vmem:[#allocation1 + $0x8] sm:$0xff pattern:$0x75316420]
        %199 = vrot.lane.b32.xlu0 %v195, 112
        %v200 = vpop.permute.xlu0 %199
        %201 = vrot.lane.b32.xlu0 %v196, 112
        %v202 = vpop.permute.xlu0 %201
        %v203 = vlaneseq
        %v204 = vand.u32 %v203, 127
        %vm205 = vcmp.lt.s32.totalorder %v204, 112
        %v206 = vsel %vm205, %v200, %v202
        %v207 = vsel %vm205, %v202, %v200
        %v210 = vrot.slane %v207, 4
        %vm211 = vcmask 1043456
        %v212 = vsel %vm211, %v206, %v210
        %v214 = vmax.f32 %v169, %v212
        %216 = vst [vmem:[#allocation1] ss:$2 sm:$0xff] %v214
        %v217 = vld.sshfl [vmem:[#allocation1] sm:$0xff pattern:$0x75316420]
        %v218 = vld.sshfl [vmem:[#allocation1 + $0x8] sm:$0xff pattern:$0x75316420]
        %221 = vst [vmem:[#allocation1] ss:$2 sm:$0xff] %v169
        %v222 = vld.sshfl [vmem:[#allocation1] sm:$0xff pattern:$0x75316420]
        %v223 = vld.sshfl [vmem:[#allocation1 + $0x8] sm:$0xff pattern:$0x75316420]
        %v226 = vsel %vm177, %v217, %v222
        %v227 = vsel %vm178, %v218, %v223
        %228 = vst [vmem:[#allocation1] ss:$2 sm:$0xff] %v169
        %v229 = vld.sshfl [vmem:[#allocation1] sm:$0xff pattern:$0x75316420]
        %v230 = vld.sshfl [vmem:[#allocation1 + $0x8] sm:$0xff pattern:$0x75316420]
        %233 = vrot.lane.b32.xlu0 %v229, 16
        %v234 = vpop.permute.xlu0 %233
        %235 = vrot.lane.b32.xlu0 %v230, 16
        %v236 = vpop.permute.xlu0 %235
        %vm237 = vcmp.lt.s32.totalorder %v204, 16
        %v238 = vsel %vm237, %v234, %v236
        %v239 = vsel %vm237, %v236, %v234
        %v240 = vmax.f32 %v226, %v239
        %v241 = vmax.f32 %v227, %v238
        %v242 = vsel %vm179, %v240, %v226
        %v243 = vsel %vm180, %v241, %v227
        %244 = vst [vmem:[#allocation1] ss:$2 sm:$0xff] %v169
        %v245 = vld.sshfl [vmem:[#allocation1] sm:$0xff pattern:$0x75316420]
        %v246 = vld.sshfl [vmem:[#allocation1 + $0x8] sm:$0xff pattern:$0x75316420]
        %249 = vrot.lane.b32.xlu0 %v245, 96
        %v250 = vpop.permute.xlu0 %249
        %251 = vrot.lane.b32.xlu0 %v246, 96
        %v252 = vpop.permute.xlu0 %251
        %vm253 = vcmp.lt.s32.totalorder %v204, 96
        %v254 = vsel %vm253, %v250, %v252
        %v255 = vsel %vm253, %v252, %v250
        %v256 = vmax.f32 %v242, %v254
        %v257 = vmax.f32 %v243, %v255
        %v258 = vsel %vm185, %v256, %v242
        %v259 = vsel %vm186, %v257, %v243
        %260 = vst [vmem:[#allocation1] ss:$2 sm:$0xff] %v169
        %v261 = vld.sshfl [vmem:[#allocation1] sm:$0xff pattern:$0x75316420]
        %v262 = vld.sshfl [vmem:[#allocation1 + $0x8] sm:$0xff pattern:$0x75316420]
        %265 = vrot.lane.b32.xlu0 %v261, 32
        %v266 = vpop.permute.xlu0 %265
        %267 = vrot.lane.b32.xlu0 %v262, 32
        %v268 = vpop.permute.xlu0 %267
        %vm269 = vcmp.lt.s32.totalorder %v204, 32
        %v270 = vsel %vm269, %v266, %v268
        %v271 = vsel %vm269, %v268, %v266
        %v272 = vmax.f32 %v258, %v271
        %v273 = vmax.f32 %v259, %v270
        %v274 = vsel %vm187, %v272, %v258
        %v275 = vsel %vm188, %v273, %v259
        %276 = vrot.lane.b32.xlu0 %v274, 127
        %v277 = vpop.permute.xlu0 %276
        %278 = vrot.lane.b32.xlu0 %v275, 127
        %v279 = vpop.permute.xlu0 %278
        %vm280 = vcmp.lt.s32.totalorder %v204, 127
        %v281 = vsel %vm280, %v277, %v279
        %v282 = vsel %vm280, %v279, %v277
        %v283 = vmax.f32 %v274, %v281
        %v284 = vmax.f32 %v275, %v282
        %v285 = vsel %vm181, %v283, %v274
        %v286 = vsel %vm182, %v284, %v275
        %287 = vrot.lane.b32.xlu0 %v274, 1
        %v288 = vpop.permute.xlu0 %287
        %289 = vrot.lane.b32.xlu0 %v275, 1
        %v290 = vpop.permute.xlu0 %289
        %vm291 = vcmp.lt.s32.totalorder %v204, 1
        %v292 = vsel %vm291, %v288, %v290
        %v293 = vsel %vm291, %v290, %v288
        %v294 = vmax.f32 %v285, %v293
        %v295 = vmax.f32 %v286, %v292
        %v296 = vsel %vm183, %v294, %v285
        %v297 = vsel %vm184, %v295, %v286
        %298 = vrot.lane.b32.xlu0 %v274, 126
        %v299 = vpop.permute.xlu0 %298
        %300 = vrot.lane.b32.xlu0 %v275, 126
        %v301 = vpop.permute.xlu0 %300
        %vm302 = vcmp.lt.s32.totalorder %v204, 126
        %v303 = vsel %vm302, %v299, %v301
        %v304 = vsel %vm302, %v301, %v299
        %v305 = vmax.f32 %v296, %v303
        %v306 = vmax.f32 %v297, %v304
        %v307 = vsel %vm189, %v305, %v296
        %v308 = vsel %vm190, %v306, %v297
        %309 = vrot.lane.b32.xlu0 %v274, 2
        %v310 = vpop.permute.xlu0 %309
        %311 = vrot.lane.b32.xlu0 %v275, 2
        %v312 = vpop.permute.xlu0 %311
        %vm313 = vcmp.lt.s32.totalorder %v204, 2
        %v314 = vsel %vm313, %v310, %v312
        %v315 = vsel %vm313, %v312, %v310
        %v316 = vmax.f32 %v307, %v315
        %v317 = vmax.f32 %v308, %v314
        %v318 = vsel %vm191, %v316, %v307
        %v319 = vsel %vm192, %v317, %v308
        %v320 = vld [vmem:[%s1] sm:$0xf]
        %322 = vset.pattern.permute.xlu0 0
        %323 = vperm.xlu0 %322, %v320
        %v324 = vpop.permute.xlu0 %323
        %v326 = vperm.slane %v318, 0
        %v327 = vperm.slane %v319, 0
        %v328 = vmul.f32 %v324, %v326
        %v329 = vmul.f32 %v324, %v327
        %s330 = scalar_lea.vmem %s1, 4
        %v331 = vld [vmem:[%s330] sm:$0xf]
        %333 = vset.pattern.permute.xlu0 0
        %334 = vperm.xlu0 %333, %v331
        %v335 = vpop.permute.xlu0 %334
        %v337 = vperm.slane %v318, 1
        %v338 = vperm.slane %v319, 1
        %v339 = vmul.f32 %v335, %v337
        %v340 = vmul.f32 %v335, %v338
        %v341 = vadd.f32 %v328, %v339
        %v342 = vadd.f32 %v329, %v340
        %s343 = scalar_lea.vmem %s1, 8
        %v344 = vld [vmem:[%s343] sm:$0xf]
        %346 = vset.pattern.permute.xlu0 0
        %347 = vperm.xlu0 %346, %v344
        %v348 = vpop.permute.xlu0 %347
        %v350 = vperm.slane %v318, 2
        %v351 = vperm.slane %v319, 2
        %v352 = vmul.f32 %v348, %v350
        %v353 = vmul.f32 %v348, %v351
        %v354 = vadd.f32 %v341, %v352
        %v355 = vadd.f32 %v342, %v353
        %s356 = scalar_lea.vmem %s1, 12
        %v357 = vld [vmem:[%s356] sm:$0xf]
        %359 = vset.pattern.permute.xlu0 0
        %360 = vperm.xlu0 %359, %v357
        %v361 = vpop.permute.xlu0 %360
        %v363 = vperm.slane %v318, 3
        %v364 = vperm.slane %v319, 3
        %v365 = vmul.f32 %v361, %v363
        %v366 = vmul.f32 %v361, %v364
        %v367 = vadd.f32 %v354, %v365
        %v368 = vadd.f32 %v355, %v366
        %v371 = vrot.slane %v368, 4
        %v372 = vsel %vm211, %v367, %v371
        %v374 = vadd.f32 %v169, %v372
        %375 = vrot.lane.b32.xlu0 %v367, 112
        %v376 = vpop.permute.xlu0 %375
        %377 = vrot.lane.b32.xlu0 %v368, 112
        %v378 = vpop.permute.xlu0 %377
        %v379 = vsel %vm205, %v376, %v378
        %v380 = vsel %vm205, %v378, %v376
        %v381 = vmax.f32 %v367, %v379
        %v382 = vmax.f32 %v368, %v380
        %v383 = vsel %vm177, %v381, %v367
        %v384 = vsel %vm178, %v382, %v368
        %385 = vrot.lane.b32.xlu0 %v367, 16
        %v386 = vpop.permute.xlu0 %385
        %387 = vrot.lane.b32.xlu0 %v368, 16
        %v388 = vpop.permute.xlu0 %387
        %v389 = vsel %vm237, %v386, %v388
        %v390 = vsel %vm237, %v388, %v386
        %v391 = vmax.f32 %v383, %v390
        %v392 = vmax.f32 %v384, %v389
        %v393 = vsel %vm179, %v391, %v383
        %v394 = vsel %vm180, %v392, %v384
        %395 = vrot.lane.b32.xlu0 %v367, 96
        %v396 = vpop.permute.xlu0 %395
        %397 = vrot.lane.b32.xlu0 %v368, 96
        %v398 = vpop.permute.xlu0 %397
        %v399 = vsel %vm253, %v396, %v398
        %v400 = vsel %vm253, %v398, %v396
        %v401 = vmax.f32 %v393, %v399
        %v402 = vmax.f32 %v394, %v400
        %v403 = vsel %vm185, %v401, %v393
        %v404 = vsel %vm186, %v402, %v394
        %405 = vrot.lane.b32.xlu0 %v367, 32
        %v406 = vpop.permute.xlu0 %405
        %407 = vrot.lane.b32.xlu0 %v368, 32
        %v408 = vpop.permute.xlu0 %407
        %v409 = vsel %vm269, %v406, %v408
        %v410 = vsel %vm269, %v408, %v406
        %v411 = vmax.f32 %v403, %v410
        %v412 = vmax.f32 %v404, %v409
        %v413 = vsel %vm187, %v411, %v403
        %v414 = vsel %vm188, %v412, %v404
        %415 = vrot.lane.b32.xlu0 %v413, 127
        %v416 = vpop.permute.xlu0 %415
        %417 = vrot.lane.b32.xlu0 %v414, 127
        %v418 = vpop.permute.xlu0 %417
        %v419 = vsel %vm280, %v416, %v418
        %v420 = vsel %vm280, %v418, %v416
        %v421 = vmax.f32 %v413, %v419
        %v422 = vmax.f32 %v414, %v420
        %v423 = vsel %vm181, %v421, %v413
        %v424 = vsel %vm182, %v422, %v414
        %425 = vrot.lane.b32.xlu0 %v413, 1
        %v426 = vpop.permute.xlu0 %425
        %427 = vrot.lane.b32.xlu0 %v414, 1
        %v428 = vpop.permute.xlu0 %427
        %v429 = vsel %vm291, %v426, %v428
        %v430 = vsel %vm291, %v428, %v426
        %v431 = vmax.f32 %v423, %v430
        %v432 = vmax.f32 %v424, %v429
        %v433 = vsel %vm183, %v431, %v423
        %v434 = vsel %vm184, %v432, %v424
        %435 = vrot.lane.b32.xlu0 %v413, 126
        %v436 = vpop.permute.xlu0 %435
        %437 = vrot.lane.b32.xlu0 %v414, 126
        %v438 = vpop.permute.xlu0 %437
        %v439 = vsel %vm302, %v436, %v438
        %v440 = vsel %vm302, %v438, %v436
        %v441 = vmax.f32 %v433, %v439
        %v442 = vmax.f32 %v434, %v440
        %v443 = vsel %vm189, %v441, %v433
        %v444 = vsel %vm190, %v442, %v434
        %445 = vrot.lane.b32.xlu0 %v413, 2
        %v446 = vpop.permute.xlu0 %445
        %447 = vrot.lane.b32.xlu0 %v414, 2
        %v448 = vpop.permute.xlu0 %447
        %v449 = vsel %vm313, %v446, %v448
        %v450 = vsel %vm313, %v448, %v446
        %v451 = vmax.f32 %v443, %v450
        %v452 = vmax.f32 %v444, %v449
        %v453 = vsel %vm191, %v451, %v443
        %v454 = vsel %vm192, %v452, %v444
        %s455 = scalar_lea.vmem %s1, 16
        %v456 = vld [vmem:[%s455] sm:$0xf]
        %458 = vset.pattern.permute.xlu0 0
        %459 = vperm.xlu0 %458, %v456
        %v460 = vpop.permute.xlu0 %459
        %v462 = vperm.slane %v453, 0
        %v463 = vperm.slane %v454, 0
        %v464 = vmul.f32 %v460, %v462
        %v465 = vmul.f32 %v460, %v463
        %s466 = scalar_lea.vmem %s1, 20
        %v467 = vld [vmem:[%s466] sm:$0xf]
        %469 = vset.pattern.permute.xlu0 0
        %470 = vperm.xlu0 %469, %v467
        %v471 = vpop.permute.xlu0 %470
        %v473 = vperm.slane %v453, 1
        %v474 = vperm.slane %v454, 1
        %v475 = vmul.f32 %v471, %v473
        %v476 = vmul.f32 %v471, %v474
        %v477 = vadd.f32 %v464, %v475
        %v478 = vadd.f32 %v465, %v476
        %s479 = scalar_lea.vmem %s1, 24
        %v480 = vld [vmem:[%s479] sm:$0xf]
        %482 = vset.pattern.permute.xlu0 0
        %483 = vperm.xlu0 %482, %v480
        %v484 = vpop.permute.xlu0 %483
        %v486 = vperm.slane %v453, 2
        %v487 = vperm.slane %v454, 2
        %v488 = vmul.f32 %v484, %v486
        %v489 = vmul.f32 %v484, %v487
        %v490 = vadd.f32 %v477, %v488
        %v491 = vadd.f32 %v478, %v489
        %s492 = scalar_lea.vmem %s1, 28
        %v493 = vld [vmem:[%s492] sm:$0xf]
        %495 = vset.pattern.permute.xlu0 0
        %496 = vperm.xlu0 %495, %v493
        %v497 = vpop.permute.xlu0 %496
        %v499 = vperm.slane %v453, 3
        %v500 = vperm.slane %v454, 3
        %v501 = vmul.f32 %v497, %v499
        %v502 = vmul.f32 %v497, %v500
        %v503 = vadd.f32 %v490, %v501
        %v504 = vadd.f32 %v491, %v502
        %v507 = vrot.slane %v504, 4
        %v508 = vsel %vm211, %v503, %v507
        %v510 = vadd.f32 %v374, %v508
        %511 = vrot.lane.b32.xlu0 %v503, 112
        %v512 = vpop.permute.xlu0 %511
        %513 = vrot.lane.b32.xlu0 %v504, 112
        %v514 = vpop.permute.xlu0 %513
        %v515 = vsel %vm205, %v512, %v514
        %v516 = vsel %vm205, %v514, %v512
        %v517 = vmax.f32 %v503, %v515
        %v518 = vmax.f32 %v504, %v516
        %v519 = vsel %vm177, %v517, %v503
        %v520 = vsel %vm178, %v518, %v504
        %521 = vrot.lane.b32.xlu0 %v503, 16
        %v522 = vpop.permute.xlu0 %521
        %523 = vrot.lane.b32.xlu0 %v504, 16
        %v524 = vpop.permute.xlu0 %523
        %v525 = vsel %vm237, %v522, %v524
        %v526 = vsel %vm237, %v524, %v522
        %v527 = vmax.f32 %v519, %v526
        %v528 = vmax.f32 %v520, %v525
        %v529 = vsel %vm179, %v527, %v519
        %v530 = vsel %vm180, %v528, %v520
        %531 = vrot.lane.b32.xlu0 %v503, 96
        %v532 = vpop.permute.xlu0 %531
        %533 = vrot.lane.b32.xlu0 %v504, 96
        %v534 = vpop.permute.xlu0 %533
        %v535 = vsel %vm253, %v532, %v534
        %v536 = vsel %vm253, %v534, %v532
        %v537 = vmax.f32 %v529, %v535
        %v538 = vmax.f32 %v530, %v536
        %v539 = vsel %vm185, %v537, %v529
        %v540 = vsel %vm186, %v538, %v530
        %541 = vrot.lane.b32.xlu0 %v503, 32
        %v542 = vpop.permute.xlu0 %541
        %543 = vrot.lane.b32.xlu0 %v504, 32
        %v544 = vpop.permute.xlu0 %543
        %v545 = vsel %vm269, %v542, %v544
        %v546 = vsel %vm269, %v544, %v542
        %v547 = vmax.f32 %v539, %v546
        %v548 = vmax.f32 %v540, %v545
        %v549 = vsel %vm187, %v547, %v539
        %v550 = vsel %vm188, %v548, %v540
        %551 = vrot.lane.b32.xlu0 %v549, 127
        %v552 = vpop.permute.xlu0 %551
        %553 = vrot.lane.b32.xlu0 %v550, 127
        %v554 = vpop.permute.xlu0 %553
        %v555 = vsel %vm280, %v552, %v554
        %v556 = vsel %vm280, %v554, %v552
        %v557 = vmax.f32 %v549, %v555
        %v558 = vmax.f32 %v550, %v556
        %v559 = vsel %vm181, %v557, %v549
        %v560 = vsel %vm182, %v558, %v550
        %561 = vrot.lane.b32.xlu0 %v549, 1
        %v562 = vpop.permute.xlu0 %561
        %563 = vrot.lane.b32.xlu0 %v550, 1
        %v564 = vpop.permute.xlu0 %563
        %v565 = vsel %vm291, %v562, %v564
        %v566 = vsel %vm291, %v564, %v562
        %v567 = vmax.f32 %v559, %v566
        %v568 = vmax.f32 %v560, %v565
        %v569 = vsel %vm183, %v567, %v559
        %v570 = vsel %vm184, %v568, %v560
        %571 = vrot.lane.b32.xlu0 %v549, 126
        %v572 = vpop.permute.xlu0 %571
        %573 = vrot.lane.b32.xlu0 %v550, 126
        %v574 = vpop.permute.xlu0 %573
        %v575 = vsel %vm302, %v572, %v574
        %v576 = vsel %vm302, %v574, %v572
        %v577 = vmax.f32 %v569, %v575
        %v578 = vmax.f32 %v570, %v576
        %v579 = vsel %vm189, %v577, %v569
        %v580 = vsel %vm190, %v578, %v570
        %581 = vrot.lane.b32.xlu0 %v549, 2
        %v582 = vpop.permute.xlu0 %581
        %583 = vrot.lane.b32.xlu0 %v550, 2
        %v584 = vpop.permute.xlu0 %583
        %v585 = vsel %vm313, %v582, %v584
        %v586 = vsel %vm313, %v584, %v582
        %v587 = vmax.f32 %v579, %v586
        %v588 = vmax.f32 %v580, %v585
        %v589 = vsel %vm191, %v587, %v579
        %v590 = vsel %vm192, %v588, %v580
        %s591 = scalar_lea.vmem %s1, 32
        %v592 = vld [vmem:[%s591] sm:$0xf]
        %594 = vset.pattern.permute.xlu0 0
        %595 = vperm.xlu0 %594, %v592
        %v596 = vpop.permute.xlu0 %595
        %v598 = vperm.slane %v589, 0
        %v599 = vperm.slane %v590, 0
        %v600 = vmul.f32 %v596, %v598
        %v601 = vmul.f32 %v596, %v599
        %s602 = scalar_lea.vmem %s1, 36
        %v603 = vld [vmem:[%s602] sm:$0xf]
        %605 = vset.pattern.permute.xlu0 0
        %606 = vperm.xlu0 %605, %v603
        %v607 = vpop.permute.xlu0 %606
        %v609 = vperm.slane %v589, 1
        %v610 = vperm.slane %v590, 1
        %v611 = vmul.f32 %v607, %v609
        %v612 = vmul.f32 %v607, %v610
        %v613 = vadd.f32 %v600, %v611
        %v614 = vadd.f32 %v601, %v612
        %s615 = scalar_lea.vmem %s1, 40
        %v616 = vld [vmem:[%s615] sm:$0xf]
        %618 = vset.pattern.permute.xlu0 0
        %619 = vperm.xlu0 %618, %v616
        %v620 = vpop.permute.xlu0 %619
        %v622 = vperm.slane %v589, 2
        %v623 = vperm.slane %v590, 2
        %v624 = vmul.f32 %v620, %v622
        %v625 = vmul.f32 %v620, %v623
        %v626 = vadd.f32 %v613, %v624
        %v627 = vadd.f32 %v614, %v625
        %s628 = scalar_lea.vmem %s1, 44
        %v629 = vld [vmem:[%s628] sm:$0xf]
        %631 = vset.pattern.permute.xlu0 0
        %632 = vperm.xlu0 %631, %v629
        %v633 = vpop.permute.xlu0 %632
        %v635 = vperm.slane %v589, 3
        %v636 = vperm.slane %v590, 3
        %v637 = vmul.f32 %v633, %v635
        %v638 = vmul.f32 %v633, %v636
        %v639 = vadd.f32 %v626, %v637
        %v640 = vadd.f32 %v627, %v638
        %v643 = vrot.slane %v640, 4
        %v644 = vsel %vm211, %v639, %v643
        %v646 = vadd.f32 %v510, %v644
        %647 = vrot.lane.b32.xlu0 %v639, 112
        %v648 = vpop.permute.xlu0 %647
        %649 = vrot.lane.b32.xlu0 %v640, 112
        %v650 = vpop.permute.xlu0 %649
        %v651 = vsel %vm205, %v648, %v650
        %v652 = vsel %vm205, %v650, %v648
        %v653 = vmax.f32 %v639, %v651
        %v654 = vmax.f32 %v640, %v652
        %v655 = vsel %vm177, %v653, %v639
        %v656 = vsel %vm178, %v654, %v640
        %657 = vrot.lane.b32.xlu0 %v639, 16
        %v658 = vpop.permute.xlu0 %657
        %659 = vrot.lane.b32.xlu0 %v640, 16
        %v660 = vpop.permute.xlu0 %659
        %v661 = vsel %vm237, %v658, %v660
        %v662 = vsel %vm237, %v660, %v658
        %v663 = vmax.f32 %v655, %v662
        %v664 = vmax.f32 %v656, %v661
        %v665 = vsel %vm179, %v663, %v655
        %v666 = vsel %vm180, %v664, %v656
        %667 = vrot.lane.b32.xlu0 %v639, 96
        %v668 = vpop.permute.xlu0 %667
        %669 = vrot.lane.b32.xlu0 %v640, 96
        %v670 = vpop.permute.xlu0 %669
        %v671 = vsel %vm253, %v668, %v670
        %v672 = vsel %vm253, %v670, %v668
        %v673 = vmax.f32 %v665, %v671
        %v674 = vmax.f32 %v666, %v672
        %v675 = vsel %vm185, %v673, %v665
        %v676 = vsel %vm186, %v674, %v666
        %677 = vrot.lane.b32.xlu0 %v639, 32
        %v678 = vpop.permute.xlu0 %677
        %679 = vrot.lane.b32.xlu0 %v640, 32
        %v680 = vpop.permute.xlu0 %679
        %v681 = vsel %vm269, %v678, %v680
        %v682 = vsel %vm269, %v680, %v678
        %v683 = vmax.f32 %v675, %v682
        %v684 = vmax.f32 %v676, %v681
        %v685 = vsel %vm187, %v683, %v675
        %v686 = vsel %vm188, %v684, %v676
        %687 = vrot.lane.b32.xlu0 %v685, 127
        %v688 = vpop.permute.xlu0 %687
        %689 = vrot.lane.b32.xlu0 %v686, 127
        %v690 = vpop.permute.xlu0 %689
        %v691 = vsel %vm280, %v688, %v690
        %v692 = vsel %vm280, %v690, %v688
        %v693 = vmax.f32 %v685, %v691
        %v694 = vmax.f32 %v686, %v692
        %v695 = vsel %vm181, %v693, %v685
        %v696 = vsel %vm182, %v694, %v686
        %697 = vrot.lane.b32.xlu0 %v685, 1
        %v698 = vpop.permute.xlu0 %697
        %699 = vrot.lane.b32.xlu0 %v686, 1
        %v700 = vpop.permute.xlu0 %699
        %v701 = vsel %vm291, %v698, %v700
        %v702 = vsel %vm291, %v700, %v698
        %v703 = vmax.f32 %v695, %v702
        %v704 = vmax.f32 %v696, %v701
        %v705 = vsel %vm183, %v703, %v695
        %v706 = vsel %vm184, %v704, %v696
        %707 = vrot.lane.b32.xlu0 %v685, 126
        %v708 = vpop.permute.xlu0 %707
        %709 = vrot.lane.b32.xlu0 %v686, 126
        %v710 = vpop.permute.xlu0 %709
        %v711 = vsel %vm302, %v708, %v710
        %v712 = vsel %vm302, %v710, %v708
        %v713 = vmax.f32 %v705, %v711
        %v714 = vmax.f32 %v706, %v712
        %v715 = vsel %vm189, %v713, %v705
        %v716 = vsel %vm190, %v714, %v706
        %717 = vrot.lane.b32.xlu0 %v685, 2
        %v718 = vpop.permute.xlu0 %717
        %719 = vrot.lane.b32.xlu0 %v686, 2
        %v720 = vpop.permute.xlu0 %719
        %v721 = vsel %vm313, %v718, %v720
        %v722 = vsel %vm313, %v720, %v718
        %v723 = vmax.f32 %v715, %v722
        %v724 = vmax.f32 %v716, %v721
        %v725 = vsel %vm191, %v723, %v715
        %v726 = vsel %vm192, %v724, %v716
        %s727 = scalar_lea.vmem %s1, 48
        %v728 = vld [vmem:[%s727] sm:$0xf]
        %730 = vset.pattern.permute.xlu0 0
        %731 = vperm.xlu0 %730, %v728
        %v732 = vpop.permute.xlu0 %731
        %v734 = vperm.slane %v725, 0
        %v735 = vperm.slane %v726, 0
        %v736 = vmul.f32 %v732, %v734
        %v737 = vmul.f32 %v732, %v735
        %s738 = scalar_lea.vmem %s1, 52
        %v739 = vld [vmem:[%s738] sm:$0xf]
        %741 = vset.pattern.permute.xlu0 0
        %742 = vperm.xlu0 %741, %v739
        %v743 = vpop.permute.xlu0 %742
        %v745 = vperm.slane %v725, 1
        %v746 = vperm.slane %v726, 1
        %v747 = vmul.f32 %v743, %v745
        %v748 = vmul.f32 %v743, %v746
        %v749 = vadd.f32 %v736, %v747
        %v750 = vadd.f32 %v737, %v748
        %s751 = scalar_lea.vmem %s1, 56
        %v752 = vld [vmem:[%s751] sm:$0xf]
        %754 = vset.pattern.permute.xlu0 0
        %755 = vperm.xlu0 %754, %v752
        %v756 = vpop.permute.xlu0 %755
        %v758 = vperm.slane %v725, 2
        %v759 = vperm.slane %v726, 2
        %v760 = vmul.f32 %v756, %v758
        %v761 = vmul.f32 %v756, %v759
        %v762 = vadd.f32 %v749, %v760
        %v763 = vadd.f32 %v750, %v761
        %s764 = scalar_lea.vmem %s1, 60
        %v765 = vld [vmem:[%s764] sm:$0xf]
        %767 = vset.pattern.permute.xlu0 0
        %768 = vperm.xlu0 %767, %v765
        %v769 = vpop.permute.xlu0 %768
        %v771 = vperm.slane %v725, 3
        %v772 = vperm.slane %v726, 3
        %v773 = vmul.f32 %v769, %v771
        %v774 = vmul.f32 %v769, %v772
        %v775 = vadd.f32 %v762, %v773
        %v776 = vadd.f32 %v763, %v774
        %v779 = vrot.slane %v776, 4
        %v780 = vsel %vm211, %v775, %v779
        %v782 = vadd.f32 %v646, %v780
        %783 = vst [vmem:[%s163] sm:$0xff] %v782
        %s784 = sand.u32 %s93, 1
        %s785 = scalar_lea.sflag [#allocation3], %s784
        %s786 = sand.u32 %s93, 1
        %s787 = smul.addr %s786, 8
        %s788 = scalar_lea.vmem [#allocation2], %s787
        // Predicated region
        $region33: #{tpu_custom_call.1} parent=31 // pred_check
          %p789 = pneg %p103
        $region34: #{tpu_custom_call.1} parent=31 // pred_check_branch
          %791 = sbr.rel (%p789) target = $region36
        $region35: #{tpu_custom_call.1} parent=31 // pred_region
          %793 = vsyncadd %s785, 0
          %s794 = smul.addr %s17, 2
          %s795 = smul.addr %s794, 4
          %s796 = scalar_lea.hbm %s3, %s795
          %s798 = sshll.u32 %s788, 4
          %s799 = int_to_ptr.vmem [resolvable:$true] %s798
          %s800 = sshll.u32 %s796, 4
          %s801 = int_to_ptr.hbm [resolvable:$true] %s800
          %803 = dma.vmem_to_hbm [thread:$0]  %s799, 128, %s801, %s785
        $region36: #{tpu_custom_call.1} parent=31 // pred_fallthru
          _
      $region32: #{tpu_custom_call.1} parent=5 // pred_fallthru
        _
      %p804 = scmp.le.s32.totalorder 2, %s12
      // Predicated region
      $region37: #{tpu_custom_call.1} parent=5 // pred_check
        %p805 = pneg %p804
      $region38: #{tpu_custom_call.1} parent=5 // pred_check_branch
        %807 = sbr.rel (%p805) target = $region40
      $region39: #{tpu_custom_call.1} parent=5 // pred_region
        %s808 = ssub.s32 %s12, 2
        // Predicated region
        $region41: #{tpu_custom_call.1} parent=39 // pred_check
          %p809 = pneg %p109
        $region42: #{tpu_custom_call.1} parent=39 // pred_check_branch
          %811 = sbr.rel (%p809) target = $region44
        $region43: #{tpu_custom_call.1} parent=39 // pred_region
          %s812 = sand.u32 %s94, 1
          %s813 = scalar_lea.sflag [#allocation3], %s812
          %s814 = sand.u32 %s94, 1
          %s815 = smul.addr %s814, 8
          %s816 = scalar_lea.vmem [#allocation2], %s815
          %818 = dma.done %s813, 128
        $region44: #{tpu_custom_call.1} parent=39 // pred_fallthru
          _
      $region40: #{tpu_custom_call.1} parent=5 // pred_fallthru
        _
    $region6: #{tpu_custom_call.1} parent=1 // loop_footer
      %s16 = sadd.s32 1, %s12
    $region7: #{tpu_custom_call.1} parent=1 // loop_footer_branch
      %11 = sbr.rel target = $region3
    $region8: #{tpu_custom_call.1} parent=1 // loop_exit
      _
    %819 = vsyncpa [#allocation3], 1
    %s820 = scalar_lea.sflag [#allocation3], 1
    %821 = vsyncpa %s820, 1

</llo_original>
